<compile_context>
chip_gen: v5e
topology: v5e:2x2
jax: 0.10.0
libtpu: 0.0.40
codegen_flags: <defaults>
</compile_context>

<pallas_src>
import functools

import jax
import jax.numpy as jnp
from jax.experimental import pallas as pl
from jax.experimental.pallas import tpu as pltpu


# ----------------------------- Pallas kernels ----------------------------- #

def _pool_kernel(x_ref, pooled_ref, gmax_ref):
    # x_ref: (bm, T, H*W) -- one row-tile of the (N*C, T, H*W) slab.
    x = x_ref[...]
    pooled = jnp.max(x, axis=-1).astype(jnp.float32)            # max over H*W
    pooled_ref[...] = pooled                                    # (bm, T)
    gmax_ref[...] = jnp.max(pooled, axis=-1, keepdims=True)     # (bm, 1): max over T,H,W


def _head_kernel(pooled_ref, gpb_ref, wg_ref, bg_ref, wa_ref, ba_ref,
                 gamma_ref, beta_ref, wb_ref, out_ref, hpad_ref, ypad_ref,
                 *, n, t, k0, k1, eps):
    nt = n * t
    c_mid = ba_ref.shape[-1]
    c_out = out_ref.shape[-1]
    p0, p1 = k0 // 2, k1 // 2

    # g = Conv3d(C, C, 1) on the globally pooled vector.  gpb is already
    # broadcast over T (time-major rows) on the host, so the broadcast of the
    # conv output over T is a plain element-wise add -- no rep-matrix matmul.
    yg = jnp.dot(gpb_ref[...], wg_ref[...],
                 preferred_element_type=jnp.float32) + bg_ref[...]
    h = pooled_ref[...].astype(jnp.float32) + yg                # (N*T, C)

    # a = Conv3d(C, C//ratio, [k0,1,1], pad=k0//2) along time.  Rows are
    # time-major, so a temporal shift by d is just a row slice of a
    # zero-padded scratch at offset (d + p0) * N -- no (NT x NT) shift matmul.
    hpad_ref[...] = jnp.zeros_like(hpad_ref)
    hpad_ref[pl.ds(p0 * n, nt), :] = h
    acc_a = jnp.zeros((nt, c_mid), jnp.float32) + ba_ref[...]
    for dt in range(k0):
        h_s = hpad_ref[pl.ds(dt * n, nt), :]                    # shifted h
        acc_a = acc_a + jnp.dot(h_s, wa_ref[dt],
                                preferred_element_type=jnp.float32)

    # BatchNorm3d in training mode: batch statistics over (N, T) per channel.
    # TODO(synk): running-mean/var buffer updates (a training side effect) are
    # not materialized; they do not affect the forward output.
    mean = jnp.mean(acc_a, axis=0, keepdims=True)
    var = jnp.mean((acc_a - mean) ** 2, axis=0, keepdims=True)
    y = (acc_a - mean) * jax.lax.rsqrt(var + eps)
    y = y * gamma_ref[...] + beta_ref[...]
    y = jnp.maximum(y, 0.0)                                     # ReLU

    # b = Conv3d(C//ratio, C, [k1,1,1], bias=False) along time, then + 1.
    ypad_ref[...] = jnp.zeros_like(ypad_ref)
    ypad_ref[pl.ds(p1 * n, nt), :] = y
    acc_b = jnp.zeros((nt, c_out), jnp.float32)
    for dt in range(k1):
        y_s = ypad_ref[pl.ds(dt * n, nt), :]
        acc_b = acc_b + jnp.dot(y_s, wb_ref[dt],
                                preferred_element_type=jnp.float32)
    out_ref[...] = acc_b + 1.0


# ------------------------------ tiling helper ------------------------------ #

def _pool_block_rows(nc, t, hw, itemsize,
                     vmem_budget_bytes=16 * 1024 * 1024):
    """Rows per pool-kernel block.

    Budget covers the double-buffered input block (2 * bm * T * HW * itemsize);
    outputs are tiny.  16 MiB of input buffering + a 32 MiB explicit
    vmem_limit_bytes is safe on every generation (v5e/v6e: 128 MiB physical,
    v7x: 64 MiB physical / 32 MiB scoped), while still giving >= 85%-of-HBM-
    roofline sized tiles and a multi-step grid for pipelining / megacore.
    """
    per_row = max(t * hw * itemsize, 1)
    bm = vmem_budget_bytes // (2 * per_row)
    bm = min(bm, 1024)                      # measured sweet spot: 256-1024 rows
    bm = max(8, (bm // 8) * 8)              # keep sublane-aligned blocks
    if bm >= nc:
        return nc                           # whole thing fits in one block
    return bm


# ------------------------------ host wrapper ------------------------------ #

def van_tada_forward(x, params, *, ratio, kernels, eps=1e-5):
    n, c, t, h, w = x.shape
    k0, k1 = kernels
    nc, nt, hw = n * c, n * t, h * w
    c_mid = params["ba"].shape[0]

    # ---- Pallas kernel 1: max over (H, W) and over (T, H, W), row-tiled ----
    # Keep the network's native activation dtype for the HBM-bound pool reads
    # (feeding bf16 activations would halve the dominant HBM traffic).
    x3 = x.reshape(nc, t, hw)
    bm = _pool_block_rows(nc, t, hw, x3.dtype.itemsize)
    pooled, gmax = pl.pallas_call(
        _pool_kernel,
        grid=(pl.cdiv(nc, bm),),
        in_specs=(pl.BlockSpec((bm, t, hw), lambda i: (i, 0, 0)),),
        out_specs=(pl.BlockSpec((bm, t), lambda i: (i, 0)),
                   pl.BlockSpec((bm, 1), lambda i: (i, 0))),
        out_shape=(jax.ShapeDtypeStruct((nc, t), jnp.float32),
                   jax.ShapeDtypeStruct((nc, 1), jnp.float32)),
        compiler_params=pltpu.CompilerParams(
            dimension_semantics=("parallel",),
            vmem_limit_bytes=32 * 1024 * 1024),
    )(x3)

    # ---- glue: time-major channel-last slabs + kernel-friendly weights ----
    # row r = tt * N + nn  (time-major) so temporal shifts are row slices.
    pooled_tm = pooled.reshape(n, c, t).transpose(2, 0, 1).reshape(nt, c)
    gp = gmax.reshape(n, c)
    gp_tm = jnp.broadcast_to(gp[None], (t, n, c)).reshape(nt, c)
    wg_t = params["wg"].T.astype(jnp.float32)              # (C_in, C_out)
    bg = params["bg"][None, :].astype(jnp.float32)         # (1, C)
    wa_t = jnp.transpose(params["wa"], (2, 1, 0)).astype(jnp.float32)  # (k0, C, Cmid)
    ba = params["ba"][None, :].astype(jnp.float32)         # (1, Cmid)
    gamma = params["gamma"][None, :].astype(jnp.float32)   # (1, Cmid)
    beta = params["beta"][None, :].astype(jnp.float32)     # (1, Cmid)
    wb_t = jnp.transpose(params["wb"], (2, 1, 0)).astype(jnp.float32)  # (k1, Cmid, C)

    head_flops = (2 * nt * c * c
                  + 2 * nt * c * c_mid * k0
                  + 2 * nt * c_mid * c * k1)
    head_bytes = 4 * (3 * nt * c + c * c + k0 * c * c_mid + k1 * c_mid * c
                      + 4 * c_mid + c)

    # ---- Pallas kernel 2: the whole post-pool head (g, a, bn, relu, b, +1) --
    # Single small block; all operands live in VMEM.  (BatchNorm batch stats
    # couple every (n, t) row, so we do not grid this tiny kernel.)
    out_tm = pl.pallas_call(
        functools.partial(_head_kernel, n=n, t=t, k0=k0, k1=k1, eps=eps),
        out_shape=jax.ShapeDtypeStruct((nt, c), jnp.float32),
        scratch_shapes=[
            pltpu.VMEM(((t + 2 * (k0 // 2)) * n, c), jnp.float32),
            pltpu.VMEM(((t + 2 * (k1 // 2)) * n, c_mid), jnp.float32),
        ],
        cost_estimate=pl.CostEstimate(flops=head_flops,
                                      transcendentals=c_mid,
                                      bytes_accessed=head_bytes),
    )(pooled_tm, gp_tm, wg_t, bg, wa_t, ba, gamma, beta, wb_t)

    out = out_tm.reshape(t, n, c).transpose(1, 2, 0)        # (N, C, T)
    return out[..., None, None]                             # (N, C, T, 1, 1)


# ------------------------- pure-JAX reference model ------------------------ #

def reference_forward(x, params, *, ratio, kernels, eps=1e-5):
    n, c, t, h, w = x.shape
    c_mid = c // ratio
    k0, k1 = kernels
    g = jnp.max(x, axis=(2, 3, 4))                          # glocalpool
    pooled = jnp.max(x, axis=(3, 4))                        # "avgpool" (max over H,W)
    yg = g @ params["wg"].T + params["bg"]
    hmix = pooled + yg[:, :, None]
    pad0 = k0 // 2
    hp = jnp.pad(hmix, ((0, 0), (0, 0), (pad0, pad0)))
    out_a = jnp.zeros((n, c_mid, t), jnp.float32) + params["ba"][None, :, None]
    for dt in range(k0):
        out_a = out_a + jnp.einsum("oc,nct->not", params["wa"][:, :, dt], hp[:, :, dt:dt + t])
    mean = out_a.mean(axis=(0, 2), keepdims=True)
    var = ((out_a - mean) ** 2).mean(axis=(0, 2), keepdims=True)
    y = (out_a - mean) / jnp.sqrt(var + eps)
    y = y * params["gamma"][None, :, None] + params["beta"][None, :, None]
    y = jnp.maximum(y, 0.0)
    pad1 = k1 // 2
    yp = jnp.pad(y, ((0, 0), (0, 0), (pad1, pad1)))
    out_b = jnp.zeros((n, c, t), jnp.float32)
    for dt in range(k1):
        out_b = out_b + jnp.einsum("oc,nct->not", params["wb"][:, :, dt], yp[:, :, dt:dt + t])
    return (out_b + 1.0)[..., None, None]


# ---------------------------------- main ----------------------------------- #

if __name__ == "__main__":
    N, C, T, H, W = 2, 4, 8, 16, 16
    RATIO = 2
    KERNELS = (3, 3)
    C_MID = C // RATIO
    K0, K1 = KERNELS

    key = jax.random.PRNGKey(0)
    kx, kg, kbg, ka, kba, kb = jax.random.split(key, 6)
    x = jax.random.normal(kx, (N, C, T, H, W), jnp.float32)

    # NOTE: the PyTorch module zero-initializes b.weight (skip_init), which
    # would make the output identically 1.  We use small nonzero values so the
    # conv-b path is actually exercised and verified against the reference.
    params = {
        "wg": 0.1 * jax.random.normal(kg, (C, C), jnp.float32),
        "bg": 0.1 * jax.random.normal(kbg, (C,), jnp.float32),
        "wa": 0.1 * jax.random.normal(ka, (C_MID, C, K0), jnp.float32),
        "ba": 0.1 * jax.random.normal(kba, (C_MID,), jnp.float32),
        "gamma": jnp.ones((C_MID,), jnp.float32),
        "beta": jnp.zeros((C_MID,), jnp.float32),
        "wb": 0.1 * jax.random.normal(kb, (C, C_MID, K1), jnp.float32),
    }

    out = jax.block_until_ready(
        van_tada_forward(x, params, ratio=RATIO, kernels=KERNELS))
    ref = reference_forward(x, params, ratio=RATIO, kernels=KERNELS)

    assert out.shape == (N, C, T, 1, 1), out.shape
    assert jnp.allclose(out, ref, atol=1e-3, rtol=1e-3), float(jnp.abs(out - ref).max())
    print("KERNEL_OK")
</pallas_src>

<mosaic_0001>
module attributes {stable_mosaic.version = 11 : i64} {
  func.func @_pool_kernel(%arg0: i32, %arg1: memref<8x8x256xf32, #tpu.memory_space<vmem>>, %arg2: memref<8x8xf32, #tpu.memory_space<vmem>>, %arg3: memref<8x1xf32, #tpu.memory_space<vmem>>) attributes {dimension_semantics = [#tpu.dimension_semantics<parallel>], iteration_bounds = array<i64: 1>, scalar_prefetch = 0 : i64, scratch_operands = 0 : i64, tpu.core_type = #tpu.core_type<tc>, window_params = [{transform_indices = @transform_0, window_bounds = array<i64: 8, 8, 256>}, {transform_indices = @transform_1, window_bounds = array<i64: 8, 8>}, {transform_indices = @transform_2, window_bounds = array<i64: 8, 1>}]} {
    %c0 = arith.constant 0 : index
    %c0_0 = arith.constant 0 : index
    %c0_1 = arith.constant 0 : index
    %0 = vector.load %arg1[%c0, %c0_0, %c0_1] : memref<8x8x256xf32, #tpu.memory_space<vmem>>, vector<8x8x256xf32>
    %cst = arith.constant dense<0xFF800000> : vector<8x8xf32>
    %1 = vector.multi_reduction <maximumf>, %0, %cst [2] : vector<8x8x256xf32> to vector<8x8xf32>
    %c0_2 = arith.constant 0 : index
    %c0_3 = arith.constant 0 : index
    %2 = vector.load %arg2[%c0_2, %c0_3] : memref<8x8xf32, #tpu.memory_space<vmem>>, vector<8x8xf32>
    tpu.vector_store %arg2[%c0_2, %c0_3], %1 {strides = array<i32>} : memref<8x8xf32, #tpu.memory_space<vmem>>, vector<8x8xf32>,
    %cst_4 = arith.constant dense<0xFF800000> : vector<8xf32>
    %3 = vector.multi_reduction <maximumf>, %1, %cst_4 [1] : vector<8x8xf32> to vector<8xf32>
    %4 = vector.shape_cast %3 : vector<8xf32> to vector<8x1xf32>
    %c0_5 = arith.constant 0 : index
    %c0_6 = arith.constant 0 : index
    %5 = vector.load %arg3[%c0_5, %c0_6] : memref<8x1xf32, #tpu.memory_space<vmem>>, vector<8x1xf32>
    tpu.vector_store %arg3[%c0_5, %c0_6], %4 {strides = array<i32>} : memref<8x1xf32, #tpu.memory_space<vmem>>, vector<8x1xf32>,
    return
  }
  func.func @transform_0(%arg0: i32) -> (i32, i32, i32) {
    %c0_i32 = arith.constant 0 : i32
    %c0_i32_0 = arith.constant 0 : i32
    %c0_i32_1 = arith.constant 0 : i32
    return %arg0, %c0_i32, %c0_i32_0 : i32, i32, i32
  }
  func.func @transform_1(%arg0: i32) -> (i32, i32) {
    %c0_i32 = arith.constant 0 : i32
    %c0_i32_0 = arith.constant 0 : i32
    return %arg0, %c0_i32 : i32, i32
  }
  func.func @transform_2(%arg0: i32) -> (i32, i32) {
    %c0_i32 = arith.constant 0 : i32
    %c0_i32_0 = arith.constant 0 : i32
    return %arg0, %c0_i32 : i32, i32
  }
}

</mosaic_0001>

<llo_original>
// kernel: tpu_custom_call.1
$region0: #{tpu_custom_call.1}
  #allocation0 [shape = 'u32[]', space=smem, size = 0x4, offset = 0x4, fixed_abs, tag = 'smem constant byte address 0x4 - core index']
  #allocation1 [shape = 'u32[72,128]{1,0:T(1,128)}', space=vmem, size = 0x9000, scoped, tag = 'internal scratch']
  %s0 = inlined_call_operand.hbm [shape: f32[8,8,256], index: 0, kind: input, shape index: {}]
  %s1 = inlined_call_operand.hbm [shape: f32[8,8], index: 1, kind: output, shape index: {0}]
  %s2 = inlined_call_operand.vmem [shape: f32[8,1], index: 2, kind: output, shape index: {1}]
  %3 = xla_tuple %s1, %s2
  %s4 = sld [smem:[#allocation0]]
  $region26: #{tpu_custom_call.1} parent=0
    _
  %s6 = ssub.s32 1, %s4
  %s7 = scalar_select 0, %s6, %s4
  $region1: #{tpu_custom_call.1} parent=0
    #allocation2 [shape = 'u8[65536]{0}', space=vmem, size = 0x10000, scoped, tag = 'input window, operand 0, single buffered']
    #allocation3 [shape = 's32[1]{0}', space=sflag, size = 0x4, scoped, tag = 'scoped memory for tpu_custom_call.1']
    #allocation4 [shape = 's32[1]{0}', space=sflag, size = 0x4, scoped, tag = 'scoped memory for tpu_custom_call.1']
    #allocation5 [shape = 'u8[4096]{0}', space=vmem, size = 0x1000, scoped, tag = 'output window, operand 0, single buffered']
    %8 = vsyncpa [#allocation3], 0
    %9 = vsyncpa [#allocation4], 0
    // Predicated region
    $region2: #{tpu_custom_call.1} parent=1 // pred_check
      _
    $region3: #{tpu_custom_call.1} parent=1 // pred_check_branch
      %11 = sbr.rel (0) target = $region5
    $region4: #{tpu_custom_call.1} parent=1 // pred_region
      %13 = vsyncadd [#allocation3], 0
      %s14 = sshll.u32 %s0, 4
      %s15 = int_to_ptr.hbm [resolvable:$true] %s14
      %s16 = sshll.u32 [#allocation2], 4
      %s17 = int_to_ptr.vmem [resolvable:$true] %s16
      %22 = dma.hbm_to_vmem [thread:$0]  %s15, 2048, %s17, [#allocation3], 256, 256, 16
    $region5: #{tpu_custom_call.1} parent=1 // pred_fallthru
      _
    // Predicated region
    $region6: #{tpu_custom_call.1} parent=1 // pred_check
      _
    $region7: #{tpu_custom_call.1} parent=1 // pred_check_branch
      %24 = sbr.rel (0) target = $region9
    $region8: #{tpu_custom_call.1} parent=1 // pred_region
      %26 = dma.done [#allocation3], 2048
    $region9: #{tpu_custom_call.1} parent=1 // pred_fallthru
      _
    %v27 = vld [vmem:[#allocation2] sm:$0xff]
    %v28 = vld [vmem:[#allocation2 + $0x8] sm:$0xff]
    %v29 = vld [vmem:[#allocation2 + $0x10] sm:$0xff]
    %v30 = vld [vmem:[#allocation2 + $0x18] sm:$0xff]
    %v31 = vld [vmem:[#allocation2 + $0x20] sm:$0xff]
    %v32 = vld [vmem:[#allocation2 + $0x28] sm:$0xff]
    %v33 = vld [vmem:[#allocation2 + $0x30] sm:$0xff]
    %v34 = vld [vmem:[#allocation2 + $0x38] sm:$0xff]
    %v35 = vld [vmem:[#allocation2 + $0x40] sm:$0xff]
    %v36 = vld [vmem:[#allocation2 + $0x48] sm:$0xff]
    %v37 = vld [vmem:[#allocation2 + $0x50] sm:$0xff]
    %v38 = vld [vmem:[#allocation2 + $0x58] sm:$0xff]
    %v39 = vld [vmem:[#allocation2 + $0x60] sm:$0xff]
    %v40 = vld [vmem:[#allocation2 + $0x68] sm:$0xff]
    %v41 = vld [vmem:[#allocation2 + $0x70] sm:$0xff]
    %v42 = vld [vmem:[#allocation2 + $0x78] sm:$0xff]
    %v43 = vmax.f32 %v27, %v28
    %44 = vmax.xlane.f32.xlu0 %v43
    %v45 = vpop.xlane.xlu0 %44
    %v46 = vmax.f32 %v29, %v30
    %47 = vmax.xlane.f32.xlu0 %v46
    %v48 = vpop.xlane.xlu0 %47
    %v49 = vmax.f32 %v31, %v32
    %50 = vmax.xlane.f32.xlu0 %v49
    %v51 = vpop.xlane.xlu0 %50
    %v52 = vmax.f32 %v33, %v34
    %53 = vmax.xlane.f32.xlu0 %v52
    %v54 = vpop.xlane.xlu0 %53
    %v55 = vmax.f32 %v35, %v36
    %56 = vmax.xlane.f32.xlu0 %v55
    %v57 = vpop.xlane.xlu0 %56
    %v58 = vmax.f32 %v37, %v38
    %59 = vmax.xlane.f32.xlu0 %v58
    %v60 = vpop.xlane.xlu0 %59
    %v61 = vmax.f32 %v39, %v40
    %62 = vmax.xlane.f32.xlu0 %v61
    %v63 = vpop.xlane.xlu0 %62
    %v64 = vmax.f32 %v41, %v42
    %65 = vmax.xlane.f32.xlu0 %v64
    %v66 = vpop.xlane.xlu0 %65
    %v75 = vlaneseq
    %v76 = vand.u32 %v75, 127
    %v77 = vperm.slane %v45, %v76
    %v78 = vperm.slane %v48, %v76
    %v79 = vperm.slane %v51, %v76
    %v80 = vperm.slane %v54, %v76
    %v81 = vperm.slane %v57, %v76
    %v82 = vperm.slane %v60, %v76
    %v83 = vperm.slane %v63, %v76
    %v84 = vperm.slane %v66, %v76
    %vm85 = vcmask 1041409
    %v86 = vsel %vm85, %v78, %v77
    %vm87 = vcmask 1042434
    %v88 = vsel %vm87, %v79, %v86
    %vm89 = vcmask 1043459
    %v90 = vsel %vm89, %v80, %v88
    %vm91 = vcmask 1044484
    %v92 = vsel %vm91, %v81, %v90
    %vm93 = vcmask 1045509
    %v94 = vsel %vm93, %v82, %v92
    %vm95 = vcmask 1046534
    %v96 = vsel %vm95, %v83, %v94
    %vm97 = vcmask 1047559
    %v98 = vsel %vm97, %v84, %v96
    %vm100 = vcmask 64512
    %101 = vst.msk [vmem:[#allocation5] sm:$0xff] %vm100, %v98
    %v102 = vsel %vm100, %v98, -inf
    %103 = vmax.xlane.f32.xlu0 %v102
    %v104 = vpop.xlane.xlu0 %103
    %vm105 = vcmask 7168
    %106 = vst.msk [vmem:[%s2] sm:$0xff] %vm105, %v104
    // Predicated region
    $region10: #{tpu_custom_call.1} parent=1 // pred_check
      _
    $region11: #{tpu_custom_call.1} parent=1 // pred_check_branch
      %108 = sbr.rel (0) target = $region13
    $region12: #{tpu_custom_call.1} parent=1 // pred_region
      %110 = vsyncadd [#allocation4], 0
      %s112 = sshll.u32 [#allocation5], 4
      %s113 = int_to_ptr.vmem [resolvable:$true] %s112
      %s114 = sshll.u32 %s1, 4
      %s115 = int_to_ptr.hbm [resolvable:$true] %s114
      %117 = dma.vmem_to_hbm [thread:$0]  %s113, 128, %s115, [#allocation4]
    $region13: #{tpu_custom_call.1} parent=1 // pred_fallthru
      _
    // Predicated region
    $region14: #{tpu_custom_call.1} parent=1 // pred_check
      _
    $region15: #{tpu_custom_call.1} parent=1 // pred_check_branch
      %119 = sbr.rel (0) target = $region17
    $region16: #{tpu_custom_call.1} parent=1 // pred_region
      _
    $region17: #{tpu_custom_call.1} parent=1 // pred_fallthru
      _
    // Predicated region
    $region18: #{tpu_custom_call.1} parent=1 // pred_check
      _
    $region19: #{tpu_custom_call.1} parent=1 // pred_check_branch
      %121 = sbr.rel (0) target = $region21
    $region20: #{tpu_custom_call.1} parent=1 // pred_region
      %123 = dma.done [#allocation4], 128
    $region21: #{tpu_custom_call.1} parent=1 // pred_fallthru
      _
    // Predicated region
    $region22: #{tpu_custom_call.1} parent=1 // pred_check
      _
    $region23: #{tpu_custom_call.1} parent=1 // pred_check_branch
      %125 = sbr.rel (0) target = $region25
    $region24: #{tpu_custom_call.1} parent=1 // pred_region
      _
    $region25: #{tpu_custom_call.1} parent=1 // pred_fallthru
      _
    %126 = vsyncpa [#allocation3], 1
    %127 = vsyncpa [#allocation4], 1

</llo_original>
